<compile_context>
chip_gen: v7x
topology: tpu7x:2x2x1
jax: 0.10.0
libtpu: 0.0.40
codegen_flags: <defaults>
</compile_context>

<pallas_src>
import math

import numpy as np
import jax
import jax.numpy as jnp
from jax.experimental import pallas as pl
from jax.experimental.pallas import tpu as pltpu


# ----------------------------------------------------------------------------
# Host-side (numpy) weight preparation: fold 0.5*DCN + bias + BN scale, build
# lane-space banded conv matrices and separable upsample matrices.
# ----------------------------------------------------------------------------
def _bilinear_1d(f):
    """1-D factor of the fill_up_weights bilinear kernel (length 2f)."""
    K = 2 * f
    fc = math.ceil(K / 2)                       # == f
    c = (2 * fc - 1 - fc % 2) / (2.0 * fc)
    return np.array([1.0 - abs(i / fc - c) for i in range(K)], np.float32)


def conv3x3_band_matrices(w, width):
    """w: (3,3,Cin,Cout) -> M: (3, width*Cin, width*Cout) such that a 3x3
    'same' conv on an NHWC image flattened to lane-dense (H, W*Cin) rows is
        out[h] = x[h-1] @ M[0] + x[h] @ M[1] + x[h+1] @ M[2]
    with zero rows at the vertical borders."""
    Cin, Cout = int(w.shape[2]), int(w.shape[3])
    m = np.zeros((3, width * Cin, width * Cout), np.float32)
    for kh in range(3):
        for wcol in range(width):
            for kw in range(3):
                iw = wcol + kw - 1
                if 0 <= iw < width:
                    m[kh, iw * Cin:(iw + 1) * Cin,
                      wcol * Cout:(wcol + 1) * Cout] = w[kh, kw]
    return m


def upsample_matrices(H, W, C, f):
    """Grouped bilinear ConvTranspose2d(k=2f, stride=f, pad=f//2, groups=C,
    fill_up_weights) is separable: up = UH @ y @ UWC on lane-dense (rows, W*C)
    activations (all channels share the same bilinear kernel)."""
    K, p = 2 * f, f // 2
    u = _bilinear_1d(f)

    def mat1d(n_in):
        n_out = (n_in - 1) * f - 2 * p + K
        m = np.zeros((n_out, n_in), np.float32)
        for o_ in range(n_out):
            for i_ in range(n_in):
                k = o_ + p - i_ * f
                if 0 <= k < K:
                    m[o_, i_] = u[k]
        return m

    UH = mat1d(H)                                             # (Ho, H)
    UW = mat1d(W)                                             # (Wo, W)
    # TODO(synk): at production C this Kronecker form wastes a factor of ~C in
    #             VMEM and MXU FLOPs; switch to a channel-blocked contraction.
    UWC = np.kron(UW.T, np.eye(C, dtype=np.float32))          # (W*C, Wo*C)
    return UH, UWC


def _prep_stage_params(p, H, W, Cin, Cout, f, eps=1e-5,
                       weights_dtype=jnp.float32):
    def fold(q):
        # DCNv2 zero-init offset conv -> mask = sigmoid(0) = 0.5 folded into w.
        # BN scale folded into the conv weights; bias stays a separate f32 row.
        w = np.asarray(q["w"], np.float32) * 0.5
        s = np.asarray(q["gamma"], np.float32) / np.sqrt(
            np.asarray(q["var"], np.float32) + eps)
        bias = (np.asarray(q["b"], np.float32)
                - np.asarray(q["mean"], np.float32)) * s + np.asarray(
                    q["beta"], np.float32)
        return w * s[None, None, None, :], bias

    wp, bp = fold(p["proj"])
    wn, bn = fold(p["node"])

    Ho = (H - 1) * f - 2 * (f // 2) + 2 * f
    Wo = (W - 1) * f - 2 * (f // 2) + 2 * f
    uh, uwc = upsample_matrices(H, W, Cout, f)

    wdt = weights_dtype
    return dict(
        mp=jnp.asarray(conv3x3_band_matrices(wp, W), wdt),    # (3, W*Cin,  W*Cout)
        bp=jnp.asarray(np.tile(bp, W)[None, :], jnp.float32), # (1, W*Cout)
        uh=jnp.asarray(uh, wdt),                               # (Ho, H)
        uwc=jnp.asarray(uwc, wdt),                             # (W*Cout, Wo*Cout)
        mn=jnp.asarray(conv3x3_band_matrices(wn, Wo), wdt),   # (3, Wo*Cout, Wo*Cout)
        bn=jnp.asarray(np.tile(bn, Wo)[None, :], jnp.float32),# (1, Wo*Cout)
        Ho=Ho, Wo=Wo,
    )


# ----------------------------------------------------------------------------
# Fused Pallas kernel: proj(DCN+BN+ReLU) -> bilinear up -> +residual ->
#                      node(DCN+BN+ReLU), whole image per grid step (batch).
# ----------------------------------------------------------------------------
def _conv3x3_banded(x2, m_ref, bias_row):
    """3x3 'same' conv (BN scale pre-folded into m) + bias + ReLU on a
    lane-dense (rows, W*Cin) slab.  The +/-1 row halo is produced with
    pltpu.roll (XLU) + an iota row mask -- no scratch buffer, no zero fill,
    no unaligned slab copies."""
    rows = x2.shape[0]
    wdt = m_ref.dtype
    x_mid = x2.astype(wdt)
    rid = jax.lax.broadcasted_iota(jnp.int32, x_mid.shape, 0)
    zero = jnp.zeros((), wdt)
    # row h of x_dn is x[h-1] (zero at h==0); row h of x_up is x[h+1] (zero at last row)
    x_dn = jnp.where(rid == 0, zero, pltpu.roll(x_mid, 1, 0))
    x_up = jnp.where(rid == rows - 1, zero, pltpu.roll(x_mid, rows - 1, 0))
    acc = jnp.dot(x_dn, m_ref[0], preferred_element_type=jnp.float32)
    acc = acc + jnp.dot(x_mid, m_ref[1], preferred_element_type=jnp.float32)
    acc = acc + jnp.dot(x_up, m_ref[2], preferred_element_type=jnp.float32)
    return jnp.maximum(acc + bias_row, 0.0)


def _make_stage_kernel(width_first):
    def kernel(x_ref, res_ref, mp_ref, bp_ref, uh_ref, uwc_ref,
               mn_ref, bn_ref, o_ref):
        # proj: DCN(3x3, zero offsets) + folded BN + ReLU on layers[i]
        y1 = _conv3x3_banded(x_ref[0], mp_ref, bp_ref[...])
        # upsample: separable bilinear ConvTranspose2d as two MXU matmuls,
        # cheaper contraction order first (width-first when W*Cout > H).
        if width_first:
            a = jnp.dot(y1.astype(uwc_ref.dtype), uwc_ref[...],
                        preferred_element_type=jnp.float32)
            up = jnp.dot(uh_ref[...], a.astype(uh_ref.dtype),
                         preferred_element_type=jnp.float32)
        else:
            a = jnp.dot(uh_ref[...], y1.astype(uh_ref.dtype),
                        preferred_element_type=jnp.float32)
            up = jnp.dot(a.astype(uwc_ref.dtype), uwc_ref[...],
                         preferred_element_type=jnp.float32)
        # node: residual add + DCN(3x3) + folded BN + ReLU, lane-dense store
        z = up + res_ref[0].astype(jnp.float32)
        o_ref[0] = _conv3x3_banded(z, mn_ref, bn_ref[...]).astype(o_ref.dtype)
    return kernel


def _pad_tile(r, c):
    """Element count of an (r, c) f32-layout slab padded to (8, 128) tiles."""
    return ((r + 7) // 8 * 8) * ((c + 127) // 128 * 128)


def ida_stage(x_nhwc, res_nhwc, p, weights_dtype=jnp.float32):
    """One IDAUp stage: layers[i] = node(up(proj(layers[i])) + layers[i-1]).
    weights_dtype=jnp.bfloat16 is recommended on v6e/v7x (f32 accumulation)."""
    N, H, W, Cin = x_nhwc.shape
    Cout = int(p["proj"]["w"].shape[-1])
    f = int(p["up_f"])
    prep = _prep_stage_params(p, H, W, Cin, Cout, f, weights_dtype=weights_dtype)
    Ho, Wo = prep["Ho"], prep["Wo"]
    assert res_nhwc.shape == (N, Ho, Wo, Cout), res_nhwc.shape

    WCi, WCo, WoC = W * Cin, W * Cout, Wo * Cout

    # free, row-major metadata reshapes to lane-dense slabs
    x2 = x_nhwc.reshape(N, H, WCi).astype(weights_dtype)
    r2 = res_nhwc.reshape(N, Ho, WoC).astype(weights_dtype)

    # pick the cheaper separable-upsample matmul order by FLOP count
    width_first = H * WoC * (WCo + Ho) <= Ho * WCo * (H + WoC)

    # advisory cost estimate for the XLA scheduler
    flops = N * (
        2 * 3 * H * WCi * WCo                                    # proj conv
        + (2 * H * WCo * WoC + 2 * Ho * H * WoC if width_first
           else 2 * Ho * H * WCo + 2 * Ho * WCo * WoC)           # upsample
        + 2 * 3 * Ho * WoC * WoC)                                # node conv
    const_bytes = sum(int(np.prod(prep[k].shape)) * prep[k].dtype.itemsize
                      for k in ("mp", "bp", "uh", "uwc", "mn", "bn"))
    bytes_accessed = int(x2.size * x2.dtype.itemsize
                         + r2.size * r2.dtype.itemsize
                         + N * Ho * WoC * 4 + const_bytes)

    # explicit scoped-VMEM budget: double-buffered activations/output, weight
    # operands, f32 intermediates; (8,128)-padded, 3x margin, 16 MiB floor.
    itm = np.dtype(weights_dtype).itemsize
    act_elems = 2 * (_pad_tile(H, WCi) + 2 * _pad_tile(Ho, WoC))
    wgt_elems = 2 * (3 * _pad_tile(WCi, WCo) + _pad_tile(Ho, H)
                     + _pad_tile(WCo, WoC) + 3 * _pad_tile(WoC, WoC))
    bias_bytes = 2 * (_pad_tile(1, WCo) + _pad_tile(1, WoC)) * 4
    vmem_needed = (act_elems + wgt_elems) * itm + bias_bytes \
        + 2 * _pad_tile(Ho, WoC) * 4
    vmem_limit = int(max(16 << 20, min(3 * vmem_needed, 64 << 20)))

    def batch3(n):
        return (n, 0, 0)

    def fix2(n):
        return (0, 0)

    def fix3(n):
        return (0, 0, 0)

    out2 = pl.pallas_call(
        _make_stage_kernel(width_first),
        out_shape=jax.ShapeDtypeStruct((N, Ho, WoC), jnp.float32),
        grid=(N,),
        in_specs=[
            pl.BlockSpec((1, H, WCi), batch3),
            pl.BlockSpec((1, Ho, WoC), batch3),
            # constant operands (index_map fixed across the grid)
            # TODO(synk): at production sizes W-tile these and single-buffer
            #             them (pipeline_mode=pl.Buffered(1)).
            pl.BlockSpec(prep["mp"].shape, fix3),
            pl.BlockSpec(prep["bp"].shape, fix2),
            pl.BlockSpec(prep["uh"].shape, fix2),
            pl.BlockSpec(prep["uwc"].shape, fix2),
            pl.BlockSpec(prep["mn"].shape, fix3),
            pl.BlockSpec(prep["bn"].shape, fix2),
        ],
        out_specs=pl.BlockSpec((1, Ho, WoC), batch3),
        compiler_params=pltpu.CompilerParams(
            dimension_semantics=("parallel",),
            vmem_limit_bytes=vmem_limit),
        cost_estimate=pl.CostEstimate(flops=int(flops), transcendentals=0,
                                      bytes_accessed=bytes_accessed),
    )(x2, r2, prep["mp"], prep["bp"], prep["uh"], prep["uwc"],
      prep["mn"], prep["bn"])

    return out2.reshape(N, Ho, Wo, Cout)


# ----------------------------------------------------------------------------
# IDAUp forward (mirrors the PyTorch module's loop)
# ----------------------------------------------------------------------------
def ida_up_forward(params, layers, startp, endp, weights_dtype=jnp.float32):
    layers = list(layers)
    for i in range(startp + 1, endp):
        layers[i] = ida_stage(layers[i], layers[i - 1], params[i - startp],
                              weights_dtype=weights_dtype)
    return layers


# ----------------------------------------------------------------------------
# Deterministic synthetic parameters
# ----------------------------------------------------------------------------
def init_deform_conv(key, cin, cout):
    kw_, kb, kg, kbe, km, kv = jax.random.split(key, 6)
    return dict(
        w=jax.random.normal(kw_, (3, 3, cin, cout), jnp.float32) * 0.1,
        b=jax.random.normal(kb, (cout,), jnp.float32) * 0.1,
        gamma=1.0 + 0.1 * jax.random.normal(kg, (cout,), jnp.float32),
        beta=0.1 * jax.random.normal(kbe, (cout,), jnp.float32),
        mean=0.1 * jax.random.normal(km, (cout,), jnp.float32),
        var=1.0 + 0.1 * jax.random.uniform(kv, (cout,), jnp.float32),
    )


# ----------------------------------------------------------------------------
# Pure-JAX (XLA) reference of the same forward pass, for a numeric cross-check
# ----------------------------------------------------------------------------
def _deform_conv_ref(x, q, eps=1e-5):
    y = jax.lax.conv_general_dilated(
        x, 0.5 * q["w"], window_strides=(1, 1), padding=((1, 1), (1, 1)),
        dimension_numbers=("NHWC", "HWIO", "NHWC"),
        precision=jax.lax.Precision.HIGHEST)
    y = y + q["b"]
    y = (y - q["mean"]) / jnp.sqrt(q["var"] + eps) * q["gamma"] + q["beta"]
    return jnp.maximum(y, 0.0)


def _upsample_ref(y, f):
    N, H, W, C = y.shape
    K, p = 2 * f, f // 2
    u = _bilinear_1d(f)
    w2 = np.outer(u, u).astype(np.float32)      # fill_up_weights (all channels equal)
    filt = jnp.asarray(
        np.broadcast_to(w2[::-1, ::-1, None, None], (K, K, 1, C)).copy())
    return jax.lax.conv_general_dilated(
        y, filt, window_strides=(1, 1),
        padding=((K - 1 - p, K - 1 - p), (K - 1 - p, K - 1 - p)),
        lhs_dilation=(f, f),
        dimension_numbers=("NHWC", "HWIO", "NHWC"),
        feature_group_count=C,
        precision=jax.lax.Precision.HIGHEST)


def ida_up_forward_reference(params, layers, startp, endp):
    layers = list(layers)
    for i in range(startp + 1, endp):
        p = params[i - startp]
        y = _upsample_ref(_deform_conv_ref(layers[i], p["proj"]), int(p["up_f"]))
        layers[i] = _deform_conv_ref(y + layers[i - 1], p["node"])
    return layers


if __name__ == "__main__":
    key = jax.random.PRNGKey(0)
    o = 4
    channels = [4, 8]
    up_f = [1, 2]
    N = 2

    k0, k1, kp, kn = jax.random.split(key, 4)
    # PyTorch-style NCHW inputs
    layer0_nchw = jax.random.normal(k0, (N, channels[0], 16, 16), jnp.float32)
    layer1_nchw = jax.random.normal(k1, (N, channels[1], 8, 8), jnp.float32)

    # NCHW -> NHWC at the boundary (channels become part of the lane dim)
    layers = [jnp.transpose(layer0_nchw, (0, 2, 3, 1)),
              jnp.transpose(layer1_nchw, (0, 2, 3, 1))]

    params = {
        1: dict(proj=init_deform_conv(kp, channels[1], o),   # DeformConv(c, o)
                node=init_deform_conv(kn, o, o),             # DeformConv(o, o)
                up_f=int(up_f[1])),
    }

    out_layers = ida_up_forward(params, layers, startp=0, endp=2)
    result = jax.block_until_ready(out_layers[1])
    assert result.shape == (N, 16, 16, o), result.shape
    assert bool(jnp.all(jnp.isfinite(result)))

    # numeric cross-check against the pure-XLA reference of the same module
    ref = ida_up_forward_reference(params, layers, startp=0, endp=2)[1]
    np.testing.assert_allclose(np.asarray(result), np.asarray(ref),
                               rtol=5e-2, atol=5e-2)
    print("KERNEL_OK")
</pallas_src>

<mosaic_0001>
module attributes {stable_mosaic.version = 11 : i64} {
  func.func @kernel(%arg0: i32, %arg1: memref<1x8x64xf32, #tpu.memory_space<vmem>>, %arg2: memref<1x16x64xf32, #tpu.memory_space<vmem>>, %arg3: memref<3x64x32xf32, #tpu.memory_space<vmem>>, %arg4: memref<1x32xf32, #tpu.memory_space<vmem>>, %arg5: memref<16x8xf32, #tpu.memory_space<vmem>>, %arg6: memref<32x64xf32, #tpu.memory_space<vmem>>, %arg7: memref<3x64x64xf32, #tpu.memory_space<vmem>>, %arg8: memref<1x64xf32, #tpu.memory_space<vmem>>, %arg9: memref<1x16x64xf32, #tpu.memory_space<vmem>>) attributes {dimension_semantics = [#tpu.dimension_semantics<parallel>], iteration_bounds = array<i64: 2>, scalar_prefetch = 0 : i64, scratch_operands = 0 : i64, tpu.core_type = #tpu.core_type<tc>, window_params = [{transform_indices = @transform_0, window_bounds = array<i64: 1, 8, 64>}, {transform_indices = @transform_1, window_bounds = array<i64: 1, 16, 64>}, {pipeline_mode = #tpu.pipeline_mode<synchronous>, transform_indices = @transform_2, window_bounds = array<i64: 3, 64, 32>}, {pipeline_mode = #tpu.pipeline_mode<synchronous>, transform_indices = @transform_3, window_bounds = array<i64: 1, 32>}, {pipeline_mode = #tpu.pipeline_mode<synchronous>, transform_indices = @transform_4, window_bounds = array<i64: 16, 8>}, {pipeline_mode = #tpu.pipeline_mode<synchronous>, transform_indices = @transform_5, window_bounds = array<i64: 32, 64>}, {pipeline_mode = #tpu.pipeline_mode<synchronous>, transform_indices = @transform_6, window_bounds = array<i64: 3, 64, 64>}, {pipeline_mode = #tpu.pipeline_mode<synchronous>, transform_indices = @transform_7, window_bounds = array<i64: 1, 64>}, {transform_indices = @transform_8, window_bounds = array<i64: 1, 16, 64>}]} {
    %c0 = arith.constant 0 : index
    %c0_0 = arith.constant 0 : index
    %c0_1 = arith.constant 0 : index
    %0 = vector.load %arg1[%c0, %c0_0, %c0_1] : memref<1x8x64xf32, #tpu.memory_space<vmem>>, vector<1x8x64xf32>
    %1 = vector.shape_cast %0 : vector<1x8x64xf32> to vector<8x64xf32>
    %c0_2 = arith.constant 0 : index
    %c0_3 = arith.constant 0 : index
    %2 = vector.load %arg4[%c0_2, %c0_3] : memref<1x32xf32, #tpu.memory_space<vmem>>, vector<1x32xf32>
    %3 = tpu.iota {dimensions = array<i32: 0>} : vector<8x64xi32>
    %c0_i32 = arith.constant 0 : i32
    %4 = vector.broadcast %c0_i32 : i32 to vector<8x64xi32>
    %5 = arith.cmpi eq, %3, %4 : vector<8x64xi32>
    %c1_i32 = arith.constant 1 : i32
    %6 = tpu.dynamic_rotate %1 by %c1_i32 dim 0 : vector<8x64xf32>, i32 -> vector<8x64xf32>
    %cst = arith.constant 0.000000e+00 : f32
    %7 = vector.broadcast %cst : f32 to vector<8x64xf32>
    %8 = arith.select %5, %7, %6 : vector<8x64xi1>, vector<8x64xf32>
    %c7_i32 = arith.constant 7 : i32
    %9 = vector.broadcast %c7_i32 : i32 to vector<8x64xi32>
    %10 = arith.cmpi eq, %3, %9 : vector<8x64xi32>
    %c7_i32_4 = arith.constant 7 : i32
    %11 = tpu.dynamic_rotate %1 by %c7_i32_4 dim 0 : vector<8x64xf32>, i32 -> vector<8x64xf32>
    %cst_5 = arith.constant 0.000000e+00 : f32
    %12 = vector.broadcast %cst_5 : f32 to vector<8x64xf32>
    %13 = arith.select %10, %12, %11 : vector<8x64xi1>, vector<8x64xf32>
    %c0_6 = arith.constant 0 : index
    %c0_7 = arith.constant 0 : index
    %c0_8 = arith.constant 0 : index
    %14 = vector.load %arg3[%c0_6, %c0_7, %c0_8] : memref<3x64x32xf32, #tpu.memory_space<vmem>>, vector<1x64x32xf32>
    %15 = vector.shape_cast %14 : vector<1x64x32xf32> to vector<64x32xf32>
    %cst_9 = arith.constant dense<0.000000e+00> : vector<8x32xf32>
    %16 = tpu.matmul %8, %15, %cst_9 {dimension_numbers = #tpu.dot_dimension_numbers<[1], [0], [0], [1], [0, 0, 1, 1], [], []>} : vector<8x64xf32>, vector<64x32xf32>, vector<8x32xf32> -> vector<8x32xf32>
    %c1 = arith.constant 1 : index
    %c0_10 = arith.constant 0 : index
    %c0_11 = arith.constant 0 : index
    %17 = vector.load %arg3[%c1, %c0_10, %c0_11] : memref<3x64x32xf32, #tpu.memory_space<vmem>>, vector<1x64x32xf32>
    %18 = vector.shape_cast %17 : vector<1x64x32xf32> to vector<64x32xf32>
    %cst_12 = arith.constant dense<0.000000e+00> : vector<8x32xf32>
    %19 = tpu.matmul %1, %18, %cst_12 {dimension_numbers = #tpu.dot_dimension_numbers<[1], [0], [0], [1], [0, 0, 1, 1], [], []>} : vector<8x64xf32>, vector<64x32xf32>, vector<8x32xf32> -> vector<8x32xf32>
    %20 = arith.addf %16, %19 : vector<8x32xf32>
    %c2 = arith.constant 2 : index
    %c0_13 = arith.constant 0 : index
    %c0_14 = arith.constant 0 : index
    %21 = vector.load %arg3[%c2, %c0_13, %c0_14] : memref<3x64x32xf32, #tpu.memory_space<vmem>>, vector<1x64x32xf32>
    %22 = vector.shape_cast %21 : vector<1x64x32xf32> to vector<64x32xf32>
    %cst_15 = arith.constant dense<0.000000e+00> : vector<8x32xf32>
    %23 = tpu.matmul %13, %22, %cst_15 {dimension_numbers = #tpu.dot_dimension_numbers<[1], [0], [0], [1], [0, 0, 1, 1], [], []>} : vector<8x64xf32>, vector<64x32xf32>, vector<8x32xf32> -> vector<8x32xf32>
    %24 = arith.addf %20, %23 : vector<8x32xf32>
    %25 = vector.broadcast %2 : vector<1x32xf32> to vector<8x32xf32>
    %26 = arith.addf %24, %25 : vector<8x32xf32>
    %cst_16 = arith.constant 0.000000e+00 : f32
    %27 = vector.broadcast %cst_16 : f32 to vector<8x32xf32>
    %28 = arith.maximumf %26, %27 : vector<8x32xf32>
    %c0_17 = arith.constant 0 : index
    %c0_18 = arith.constant 0 : index
    %29 = vector.load %arg6[%c0_17, %c0_18] : memref<32x64xf32, #tpu.memory_space<vmem>>, vector<32x64xf32>
    %cst_19 = arith.constant dense<0.000000e+00> : vector<8x64xf32>
    %30 = tpu.matmul %28, %29, %cst_19 {dimension_numbers = #tpu.dot_dimension_numbers<[1], [0], [0], [1], [0, 0, 1, 1], [], []>} : vector<8x32xf32>, vector<32x64xf32>, vector<8x64xf32> -> vector<8x64xf32>
    %c0_20 = arith.constant 0 : index
    %c0_21 = arith.constant 0 : index
    %31 = vector.load %arg5[%c0_20, %c0_21] : memref<16x8xf32, #tpu.memory_space<vmem>>, vector<16x8xf32>
    %cst_22 = arith.constant dense<0.000000e+00> : vector<16x64xf32>
    %32 = tpu.matmul %31, %30, %cst_22 {dimension_numbers = #tpu.dot_dimension_numbers<[1], [0], [0], [1], [0, 0, 1, 1], [], []>} : vector<16x8xf32>, vector<8x64xf32>, vector<16x64xf32> -> vector<16x64xf32>
    %c0_23 = arith.constant 0 : index
    %c0_24 = arith.constant 0 : index
    %c0_25 = arith.constant 0 : index
    %33 = vector.load %arg2[%c0_23, %c0_24, %c0_25] : memref<1x16x64xf32, #tpu.memory_space<vmem>>, vector<1x16x64xf32>
    %34 = vector.shape_cast %33 : vector<1x16x64xf32> to vector<16x64xf32>
    %35 = arith.addf %32, %34 : vector<16x64xf32>
    %c0_26 = arith.constant 0 : index
    %c0_27 = arith.constant 0 : index
    %36 = vector.load %arg8[%c0_26, %c0_27] : memref<1x64xf32, #tpu.memory_space<vmem>>, vector<1x64xf32>
    %37 = tpu.iota {dimensions = array<i32: 0>} : vector<16x64xi32>
    %c0_i32_28 = arith.constant 0 : i32
    %38 = vector.broadcast %c0_i32_28 : i32 to vector<16x64xi32>
    %39 = arith.cmpi eq, %37, %38 : vector<16x64xi32>
    %c1_i32_29 = arith.constant 1 : i32
    %40 = tpu.dynamic_rotate %35 by %c1_i32_29 dim 0 : vector<16x64xf32>, i32 -> vector<16x64xf32>
    %cst_30 = arith.constant 0.000000e+00 : f32
    %41 = vector.broadcast %cst_30 : f32 to vector<16x64xf32>
    %42 = arith.select %39, %41, %40 : vector<16x64xi1>, vector<16x64xf32>
    %c15_i32 = arith.constant 15 : i32
    %43 = vector.broadcast %c15_i32 : i32 to vector<16x64xi32>
    %44 = arith.cmpi eq, %37, %43 : vector<16x64xi32>
    %c15_i32_31 = arith.constant 15 : i32
    %45 = tpu.dynamic_rotate %35 by %c15_i32_31 dim 0 : vector<16x64xf32>, i32 -> vector<16x64xf32>
    %cst_32 = arith.constant 0.000000e+00 : f32
    %46 = vector.broadcast %cst_32 : f32 to vector<16x64xf32>
    %47 = arith.select %44, %46, %45 : vector<16x64xi1>, vector<16x64xf32>
    %c0_33 = arith.constant 0 : index
    %c0_34 = arith.constant 0 : index
    %c0_35 = arith.constant 0 : index
    %48 = vector.load %arg7[%c0_33, %c0_34, %c0_35] : memref<3x64x64xf32, #tpu.memory_space<vmem>>, vector<1x64x64xf32>
    %49 = vector.shape_cast %48 : vector<1x64x64xf32> to vector<64x64xf32>
    %cst_36 = arith.constant dense<0.000000e+00> : vector<16x64xf32>
    %50 = tpu.matmul %42, %49, %cst_36 {dimension_numbers = #tpu.dot_dimension_numbers<[1], [0], [0], [1], [0, 0, 1, 1], [], []>} : vector<16x64xf32>, vector<64x64xf32>, vector<16x64xf32> -> vector<16x64xf32>
    %c1_37 = arith.constant 1 : index
    %c0_38 = arith.constant 0 : index
    %c0_39 = arith.constant 0 : index
    %51 = vector.load %arg7[%c1_37, %c0_38, %c0_39] : memref<3x64x64xf32, #tpu.memory_space<vmem>>, vector<1x64x64xf32>
    %52 = vector.shape_cast %51 : vector<1x64x64xf32> to vector<64x64xf32>
    %cst_40 = arith.constant dense<0.000000e+00> : vector<16x64xf32>
    %53 = tpu.matmul %35, %52, %cst_40 {dimension_numbers = #tpu.dot_dimension_numbers<[1], [0], [0], [1], [0, 0, 1, 1], [], []>} : vector<16x64xf32>, vector<64x64xf32>, vector<16x64xf32> -> vector<16x64xf32>
    %54 = arith.addf %50, %53 : vector<16x64xf32>
    %c2_41 = arith.constant 2 : index
    %c0_42 = arith.constant 0 : index
    %c0_43 = arith.constant 0 : index
    %55 = vector.load %arg7[%c2_41, %c0_42, %c0_43] : memref<3x64x64xf32, #tpu.memory_space<vmem>>, vector<1x64x64xf32>
    %56 = vector.shape_cast %55 : vector<1x64x64xf32> to vector<64x64xf32>
    %cst_44 = arith.constant dense<0.000000e+00> : vector<16x64xf32>
    %57 = tpu.matmul %47, %56, %cst_44 {dimension_numbers = #tpu.dot_dimension_numbers<[1], [0], [0], [1], [0, 0, 1, 1], [], []>} : vector<16x64xf32>, vector<64x64xf32>, vector<16x64xf32> -> vector<16x64xf32>
    %58 = arith.addf %54, %57 : vector<16x64xf32>
    %59 = vector.broadcast %36 : vector<1x64xf32> to vector<16x64xf32>
    %60 = arith.addf %58, %59 : vector<16x64xf32>
    %cst_45 = arith.constant 0.000000e+00 : f32
    %61 = vector.broadcast %cst_45 : f32 to vector<16x64xf32>
    %62 = arith.maximumf %60, %61 : vector<16x64xf32>
    %c0_46 = arith.constant 0 : index
    %c0_47 = arith.constant 0 : index
    %c0_48 = arith.constant 0 : index
    %63 = vector.load %arg9[%c0_46, %c0_47, %c0_48] : memref<1x16x64xf32, #tpu.memory_space<vmem>>, vector<1x16x64xf32>
    %64 = vector.shape_cast %63 : vector<1x16x64xf32> to vector<16x64xf32>
    %65 = vector.shape_cast %62 : vector<16x64xf32> to vector<1x16x64xf32>
    tpu.vector_store %arg9[%c0_46, %c0_47, %c0_48], %65 {strides = array<i32>} : memref<1x16x64xf32, #tpu.memory_space<vmem>>, vector<1x16x64xf32>,
    return
  }
  func.func @transform_0(%arg0: i32) -> (i32, i32, i32) {
    %c0_i32 = arith.constant 0 : i32
    %c0_i32_0 = arith.constant 0 : i32
    %c0_i32_1 = arith.constant 0 : i32
    return %arg0, %c0_i32, %c0_i32_0 : i32, i32, i32
  }
  func.func @transform_1(%arg0: i32) -> (i32, i32, i32) {
    %c0_i32 = arith.constant 0 : i32
    %c0_i32_0 = arith.constant 0 : i32
    %c0_i32_1 = arith.constant 0 : i32
    return %arg0, %c0_i32, %c0_i32_0 : i32, i32, i32
  }
  func.func @transform_2(%arg0: i32) -> (i32, i32, i32) {
    %c0_i32 = arith.constant 0 : i32
    %c0_i32_0 = arith.constant 0 : i32
    %c0_i32_1 = arith.constant 0 : i32
    %c0_i32_2 = arith.constant 0 : i32
    return %c0_i32, %c0_i32_0, %c0_i32_1 : i32, i32, i32
  }
  func.func @transform_3(%arg0: i32) -> (i32, i32) {
    %c0_i32 = arith.constant 0 : i32
    %c0_i32_0 = arith.constant 0 : i32
    %c0_i32_1 = arith.constant 0 : i32
    return %c0_i32, %c0_i32_0 : i32, i32
  }
  func.func @transform_4(%arg0: i32) -> (i32, i32) {
    %c0_i32 = arith.constant 0 : i32
    %c0_i32_0 = arith.constant 0 : i32
    %c0_i32_1 = arith.constant 0 : i32
    return %c0_i32, %c0_i32_0 : i32, i32
  }
  func.func @transform_5(%arg0: i32) -> (i32, i32) {
    %c0_i32 = arith.constant 0 : i32
    %c0_i32_0 = arith.constant 0 : i32
    %c0_i32_1 = arith.constant 0 : i32
    return %c0_i32, %c0_i32_0 : i32, i32
  }
  func.func @transform_6(%arg0: i32) -> (i32, i32, i32) {
    %c0_i32 = arith.constant 0 : i32
    %c0_i32_0 = arith.constant 0 : i32
    %c0_i32_1 = arith.constant 0 : i32
    %c0_i32_2 = arith.constant 0 : i32
    return %c0_i32, %c0_i32_0, %c0_i32_1 : i32, i32, i32
  }
  func.func @transform_7(%arg0: i32) -> (i32, i32) {
    %c0_i32 = arith.constant 0 : i32
    %c0_i32_0 = arith.constant 0 : i32
    %c0_i32_1 = arith.constant 0 : i32
    return %c0_i32, %c0_i32_0 : i32, i32
  }
  func.func @transform_8(%arg0: i32) -> (i32, i32, i32) {
    %c0_i32 = arith.constant 0 : i32
    %c0_i32_0 = arith.constant 0 : i32
    %c0_i32_1 = arith.constant 0 : i32
    return %arg0, %c0_i32, %c0_i32_0 : i32, i32, i32
  }
}

</mosaic_0001>

<llo_original>
// kernel: tpu_custom_call.1
$region0: #{tpu_custom_call.1}
  #allocation0 [shape = 'u32[]', space=smem, size = 0x4, offset = 0x4, fixed_abs, tag = 'smem constant byte address 0x4 - core index']
  #allocation1 [shape = 'u32[144,128]{1,0:T(1,128)}', space=vmem, size = 0x12000, scoped, tag = 'internal scratch']
  %s0 = inlined_call_operand.vmem [shape: f32[2,8,64], index: 0, kind: input, shape index: {}]
  %s1 = inlined_call_operand.vmem [shape: f32[2,16,64], index: 1, kind: input, shape index: {}]
  %s2 = inlined_call_operand.vmem [shape: f32[3,64,32], index: 2, kind: input, shape index: {}]
  %s3 = inlined_call_operand.vmem [shape: f32[1,32], index: 3, kind: input, shape index: {}]
  %s4 = inlined_call_operand.vmem [shape: f32[16,8], index: 4, kind: input, shape index: {}]
  %s5 = inlined_call_operand.vmem [shape: f32[32,64], index: 5, kind: input, shape index: {}]
  %s6 = inlined_call_operand.vmem [shape: f32[3,64,64], index: 6, kind: input, shape index: {}]
  %s7 = inlined_call_operand.vmem [shape: f32[1,64], index: 7, kind: input, shape index: {}]
  %s8 = inlined_call_operand.hbm [shape: f32[2,16,64], index: 8, kind: output, shape index: {}]
  %s9 = sld [smem:[#allocation0]]
  $region65: #{tpu_custom_call.1} parent=0
    _
  %s11 = ssub.s32 1, %s9
  %s12 = scalar_select 0, %s11, %s9
  $region1: #{tpu_custom_call.1} parent=0
    #allocation2 [shape = 'u8[16384]{0}', space=vmem, size = 0x4000, scoped, tag = 'output window, operand 0']
    #allocation3 [shape = 's32[2]{0}', space=sflag, size = 0x8, scoped, tag = 'scoped memory for tpu_custom_call.1']
    %13 = vsyncpa [#allocation3], 0
    %s14 = scalar_lea.sflag [#allocation3], 1
    %15 = vsyncpa %s14, 0
    loop: start=0, step=1, limit=4
    $region2: #{tpu_custom_call.1} parent=1 // loop_pre_header
      _
    $region3: #{tpu_custom_call.1} parent=1 // loop_header
      %s17 = sphi 0, %s21
      %p18 = scmp.ge.s32.totalorder %s17, 4
      %s27 = sphi 0, %s29
      %s30 = sphi 0, %s27
      %s31 = sphi 0, %s30
      %s47 = sphi 0, %s31
      %s53 = sphi 0, %s55
      %s56 = sphi 0, %s53
      %s57 = sphi 0, %s56
      %s73 = sphi 0, %s57
      %s77 = sphi 0, %s77
      %s79 = sphi 0, %s77
      %s80 = sphi 0, %s79
      %s94 = sphi 0, %s80
      %s98 = sphi 0, %s98
      %s100 = sphi 0, %s98
      %s101 = sphi 0, %s100
      %s115 = sphi 0, %s101
      %s119 = sphi 0, %s119
      %s121 = sphi 0, %s119
      %s122 = sphi 0, %s121
      %s136 = sphi 0, %s122
      %s140 = sphi 0, %s140
      %s142 = sphi 0, %s140
      %s143 = sphi 0, %s142
      %s157 = sphi 0, %s143
      %s161 = sphi 0, %s161
      %s163 = sphi 0, %s161
      %s164 = sphi 0, %s163
      %s178 = sphi 0, %s164
      %s182 = sphi 0, %s182
      %s184 = sphi 0, %s182
      %s185 = sphi 0, %s184
      %s199 = sphi 0, %s185
      %s205 = sphi 0, %s207
      %s208 = sphi 0, %s205
      %s209 = sphi 0, %s208
      %s225 = sphi 0, %s209
    $region4: #{tpu_custom_call.1} parent=1 // loop_header_branch
      %20 = sbr.rel (%p18) target = $region8
    $region5: #{tpu_custom_call.1} parent=1 // loop_body
      %s22 = ssub.s32 %s17, 1
      %s23 = ssub.s32 %s17, 2
      %s24 = sadd.s32 %s17, 1
      %s25 = ssub.s32 %s17, %s24
      %p26 = scmp.eq.s32.totalorder %s25, 0
      %s28 = sadd.s32 %s27, 1
      %s29 = scalar_select %p26, %s27, %s28
      %p32 = pneg %p26
      %p33 = scmp.eq.s32.totalorder %s17, 1
      %p34 = por %p32, %p33
      %p35 = scmp.ne.s32.totalorder %s27, %s30
      %p36 = scmp.eq.s32.totalorder %s17, 0
      %p37 = por %p35, %p36
      %p38 = scmp.ne.s32.totalorder %s27, %s30
      %p39 = scmp.eq.s32.totalorder %s22, 1
      %p40 = por %p38, %p39
      %p41 = scmp.ne.s32.totalorder %s30, %s31
      %p42 = scmp.eq.s32.totalorder %s22, 0
      %p43 = por %p41, %p42
      %p44 = scmp.ne.s32.totalorder %s30, %s31
      %p45 = scmp.eq.s32.totalorder %s23, 1
      %p46 = por %p44, %p45
      %p48 = scmp.ne.s32.totalorder %s31, %s47
      %p49 = scmp.eq.s32.totalorder %s23, 0
      %p50 = por %p48, %p49
      %s51 = ssub.s32 %s17, %s24
      %p52 = scmp.eq.s32.totalorder %s51, 0
      %s54 = sadd.s32 %s53, 1
      %s55 = scalar_select %p52, %s53, %s54
      %p58 = pneg %p52
      %p59 = scmp.eq.s32.totalorder %s17, 1
      %p60 = por %p58, %p59
      %p61 = scmp.ne.s32.totalorder %s53, %s56
      %p62 = scmp.eq.s32.totalorder %s17, 0
      %p63 = por %p61, %p62
      %p64 = scmp.ne.s32.totalorder %s53, %s56
      %p65 = scmp.eq.s32.totalorder %s22, 1
      %p66 = por %p64, %p65
      %p67 = scmp.ne.s32.totalorder %s56, %s57
      %p68 = scmp.eq.s32.totalorder %s22, 0
      %p69 = por %p67, %p68
      %p70 = scmp.ne.s32.totalorder %s56, %s57
      %p71 = scmp.eq.s32.totalorder %s23, 1
      %p72 = por %p70, %p71
      %p74 = scmp.ne.s32.totalorder %s57, %s73
      %p75 = scmp.eq.s32.totalorder %s23, 0
      %p76 = por %p74, %p75
      %s78 = sadd.s32 %s77, 1
      %p81 = scmp.eq.s32.totalorder %s17, 1
      %p82 = scmp.ne.s32.totalorder %s77, %s79
      %p83 = scmp.eq.s32.totalorder %s17, 0
      %p84 = por %p82, %p83
      %p85 = scmp.ne.s32.totalorder %s77, %s79
      %p86 = scmp.eq.s32.totalorder %s22, 1
      %p87 = por %p85, %p86
      %p88 = scmp.ne.s32.totalorder %s79, %s80
      %p89 = scmp.eq.s32.totalorder %s22, 0
      %p90 = por %p88, %p89
      %p91 = scmp.ne.s32.totalorder %s79, %s80
      %p92 = scmp.eq.s32.totalorder %s23, 1
      %p93 = por %p91, %p92
      %p95 = scmp.ne.s32.totalorder %s80, %s94
      %p96 = scmp.eq.s32.totalorder %s23, 0
      %p97 = por %p95, %p96
      %s99 = sadd.s32 %s98, 1
      %p102 = scmp.eq.s32.totalorder %s17, 1
      %p103 = scmp.ne.s32.totalorder %s98, %s100
      %p104 = scmp.eq.s32.totalorder %s17, 0
      %p105 = por %p103, %p104
      %p106 = scmp.ne.s32.totalorder %s98, %s100
      %p107 = scmp.eq.s32.totalorder %s22, 1
      %p108 = por %p106, %p107
      %p109 = scmp.ne.s32.totalorder %s100, %s101
      %p110 = scmp.eq.s32.totalorder %s22, 0
      %p111 = por %p109, %p110
      %p112 = scmp.ne.s32.totalorder %s100, %s101
      %p113 = scmp.eq.s32.totalorder %s23, 1
      %p114 = por %p112, %p113
      %p116 = scmp.ne.s32.totalorder %s101, %s115
      %p117 = scmp.eq.s32.totalorder %s23, 0
      %p118 = por %p116, %p117
      %s120 = sadd.s32 %s119, 1
      %p123 = scmp.eq.s32.totalorder %s17, 1
      %p124 = scmp.ne.s32.totalorder %s119, %s121
      %p125 = scmp.eq.s32.totalorder %s17, 0
      %p126 = por %p124, %p125
      %p127 = scmp.ne.s32.totalorder %s119, %s121
      %p128 = scmp.eq.s32.totalorder %s22, 1
      %p129 = por %p127, %p128
      %p130 = scmp.ne.s32.totalorder %s121, %s122
      %p131 = scmp.eq.s32.totalorder %s22, 0
      %p132 = por %p130, %p131
      %p133 = scmp.ne.s32.totalorder %s121, %s122
      %p134 = scmp.eq.s32.totalorder %s23, 1
      %p135 = por %p133, %p134
      %p137 = scmp.ne.s32.totalorder %s122, %s136
      %p138 = scmp.eq.s32.totalorder %s23, 0
      %p139 = por %p137, %p138
      %s141 = sadd.s32 %s140, 1
      %p144 = scmp.eq.s32.totalorder %s17, 1
      %p145 = scmp.ne.s32.totalorder %s140, %s142
      %p146 = scmp.eq.s32.totalorder %s17, 0
      %p147 = por %p145, %p146
      %p148 = scmp.ne.s32.totalorder %s140, %s142
      %p149 = scmp.eq.s32.totalorder %s22, 1
      %p150 = por %p148, %p149
      %p151 = scmp.ne.s32.totalorder %s142, %s143
      %p152 = scmp.eq.s32.totalorder %s22, 0
      %p153 = por %p151, %p152
      %p154 = scmp.ne.s32.totalorder %s142, %s143
      %p155 = scmp.eq.s32.totalorder %s23, 1
      %p156 = por %p154, %p155
      %p158 = scmp.ne.s32.totalorder %s143, %s157
      %p159 = scmp.eq.s32.totalorder %s23, 0
      %p160 = por %p158, %p159
      %s162 = sadd.s32 %s161, 1
      %p165 = scmp.eq.s32.totalorder %s17, 1
      %p166 = scmp.ne.s32.totalorder %s161, %s163
      %p167 = scmp.eq.s32.totalorder %s17, 0
      %p168 = por %p166, %p167
      %p169 = scmp.ne.s32.totalorder %s161, %s163
      %p170 = scmp.eq.s32.totalorder %s22, 1
      %p171 = por %p169, %p170
      %p172 = scmp.ne.s32.totalorder %s163, %s164
      %p173 = scmp.eq.s32.totalorder %s22, 0
      %p174 = por %p172, %p173
      %p175 = scmp.ne.s32.totalorder %s163, %s164
      %p176 = scmp.eq.s32.totalorder %s23, 1
      %p177 = por %p175, %p176
      %p179 = scmp.ne.s32.totalorder %s164, %s178
      %p180 = scmp.eq.s32.totalorder %s23, 0
      %p181 = por %p179, %p180
      %s183 = sadd.s32 %s182, 1
      %p186 = scmp.eq.s32.totalorder %s17, 1
      %p187 = scmp.ne.s32.totalorder %s182, %s184
      %p188 = scmp.eq.s32.totalorder %s17, 0
      %p189 = por %p187, %p188
      %p190 = scmp.ne.s32.totalorder %s182, %s184
      %p191 = scmp.eq.s32.totalorder %s22, 1
      %p192 = por %p190, %p191
      %p193 = scmp.ne.s32.totalorder %s184, %s185
      %p194 = scmp.eq.s32.totalorder %s22, 0
      %p195 = por %p193, %p194
      %p196 = scmp.ne.s32.totalorder %s184, %s185
      %p197 = scmp.eq.s32.totalorder %s23, 1
      %p198 = por %p196, %p197
      %p200 = scmp.ne.s32.totalorder %s185, %s199
      %p201 = scmp.eq.s32.totalorder %s23, 0
      %p202 = por %p200, %p201
      %s203 = ssub.s32 %s17, %s24
      %p204 = scmp.eq.s32.totalorder %s203, 0
      %s206 = sadd.s32 %s205, 1
      %s207 = scalar_select %p204, %s205, %s206
      %p210 = pneg %p204
      %p211 = scmp.eq.s32.totalorder %s17, 1
      %p212 = por %p210, %p211
      %p213 = scmp.ne.s32.totalorder %s205, %s208
      %p214 = scmp.eq.s32.totalorder %s17, 0
      %p215 = por %p213, %p214
      %p216 = scmp.ne.s32.totalorder %s205, %s208
      %p217 = scmp.eq.s32.totalorder %s22, 1
      %p218 = por %p216, %p217
      %p219 = scmp.ne.s32.totalorder %s208, %s209
      %p220 = scmp.eq.s32.totalorder %s22, 0
      %p221 = por %p219, %p220
      %p222 = scmp.ne.s32.totalorder %s208, %s209
      %p223 = scmp.eq.s32.totalorder %s23, 1
      %p224 = por %p222, %p223
      %p226 = scmp.ne.s32.totalorder %s209, %s225
      %p227 = scmp.eq.s32.totalorder %s23, 0
      %p228 = por %p226, %p227
      %p229 = scmp.le.s32.totalorder 1, %s17
      %p230 = scmp.lt.s32.totalorder %s17, 3
      %p231 = pnand %p229, %p230
      %p232 = pneg %p231
      // Predicated region
      $region9: #{tpu_custom_call.1} parent=5 // pred_check
        _
      $region10: #{tpu_custom_call.1} parent=5 // pred_check_branch
        %234 = sbr.rel (%p231) target = $region12
      $region11: #{tpu_custom_call.1} parent=5 // pred_region
        %s235 = ssub.s32 %s17, 1
        // Predicated region
        $region13: #{tpu_custom_call.1} parent=11 // pred_check
          %p236 = pneg %p90
        $region14: #{tpu_custom_call.1} parent=11 // pred_check_branch
          %238 = sbr.rel (%p236) target = $region16
        $region15: #{tpu_custom_call.1} parent=11 // pred_region
          _
        $region16: #{tpu_custom_call.1} parent=11 // pred_fallthru
          _
        // Predicated region
        $region17: #{tpu_custom_call.1} parent=11 // pred_check
          %p239 = pneg %p111
        $region18: #{tpu_custom_call.1} parent=11 // pred_check_branch
          %241 = sbr.rel (%p239) target = $region20
        $region19: #{tpu_custom_call.1} parent=11 // pred_region
          _
        $region20: #{tpu_custom_call.1} parent=11 // pred_fallthru
          _
        // Predicated region
        $region21: #{tpu_custom_call.1} parent=11 // pred_check
          %p242 = pneg %p132
        $region22: #{tpu_custom_call.1} parent=11 // pred_check_branch
          %244 = sbr.rel (%p242) target = $region24
        $region23: #{tpu_custom_call.1} parent=11 // pred_region
          _
        $region24: #{tpu_custom_call.1} parent=11 // pred_fallthru
          _
        // Predicated region
        $region25: #{tpu_custom_call.1} parent=11 // pred_check
          %p245 = pneg %p153
        $region26: #{tpu_custom_call.1} parent=11 // pred_check_branch
          %247 = sbr.rel (%p245) target = $region28
        $region27: #{tpu_custom_call.1} parent=11 // pred_region
          _
        $region28: #{tpu_custom_call.1} parent=11 // pred_fallthru
          _
        // Predicated region
        $region29: #{tpu_custom_call.1} parent=11 // pred_check
          %p248 = pneg %p174
        $region30: #{tpu_custom_call.1} parent=11 // pred_check_branch
          %250 = sbr.rel (%p248) target = $region32
        $region31: #{tpu_custom_call.1} parent=11 // pred_region
          _
        $region32: #{tpu_custom_call.1} parent=11 // pred_fallthru
          _
        // Predicated region
        $region33: #{tpu_custom_call.1} parent=11 // pred_check
          %p251 = pneg %p195
        $region34: #{tpu_custom_call.1} parent=11 // pred_check_branch
          %253 = sbr.rel (%p251) target = $region36
        $region35: #{tpu_custom_call.1} parent=11 // pred_region
          _
        $region36: #{tpu_custom_call.1} parent=11 // pred_fallthru
          _
      $region12: #{tpu_custom_call.1} parent=5 // pred_fallthru
        _
      %p254 = scmp.lt.s32.totalorder %s17, 2
      // Predicated region
      $region37: #{tpu_custom_call.1} parent=5 // pred_check
        %p255 = pneg %p254
      $region38: #{tpu_custom_call.1} parent=5 // pred_check_branch
        %257 = sbr.rel (%p255) target = $region40
      $region39: #{tpu_custom_call.1} parent=5 // pred_region
        // Predicated region
        $region41: #{tpu_custom_call.1} parent=39 // pred_check
          %p258 = pneg %p37
        $region42: #{tpu_custom_call.1} parent=39 // pred_check_branch
          %260 = sbr.rel (%p258) target = $region44
        $region43: #{tpu_custom_call.1} parent=39 // pred_region
          %p261 = scmp.lt.s32.totalorder %s17, 1
          %s262 = scalar_select %p261, %s17, 1
          %s263 = smul.addr %s262, 8
          %s264 = scalar_lea.vmem %s0, %s263
        $region44: #{tpu_custom_call.1} parent=39 // pred_fallthru
          _
        // Predicated region
        $region45: #{tpu_custom_call.1} parent=39 // pred_check
          %p265 = pneg %p63
        $region46: #{tpu_custom_call.1} parent=39 // pred_check_branch
          %267 = sbr.rel (%p265) target = $region48
        $region47: #{tpu_custom_call.1} parent=39 // pred_region
          %p268 = scmp.lt.s32.totalorder %s17, 1
          %s269 = scalar_select %p268, %s17, 1
          %s270 = smul.addr %s269, 2
          %s271 = smul.addr %s270, 8
          %s272 = scalar_lea.vmem %s1, %s271
        $region48: #{tpu_custom_call.1} parent=39 // pred_fallthru
          _
      $region40: #{tpu_custom_call.1} parent=5 // pred_fallthru
        _
      %p273 = scmp.le.s32.totalorder 1, %s17
      %p274 = scmp.lt.s32.totalorder %s17, 3
      %p275 = pnand %p273, %p274
      %p276 = pneg %p275
      // Predicated region
      $region49: #{tpu_custom_call.1} parent=5 // pred_check
        _
      $region50: #{tpu_custom_call.1} parent=5 // pred_check_branch
        %278 = sbr.rel (%p275) target = $region52
      $region51: #{tpu_custom_call.1} parent=5 // pred_region
        %s279 = ssub.s32 %s17, 1
        %p280 = scmp.lt.s32.totalorder %s22, 1
        %s281 = scalar_select %p280, %s22, 1
        %s282 = smul.addr %s281, 8
        %s283 = scalar_lea.vmem %s0, %s282
        %p284 = pneg %p43
        %p285 = pneg %p40
        %p286 = scmp.lt.s32.totalorder %s22, 1
        %s287 = scalar_select %p286, %s22, 1
        %s288 = smul.addr %s287, 2
        %s289 = smul.addr %s288, 8
        %s290 = scalar_lea.vmem %s1, %s289
        %p291 = pneg %p69
        %p292 = pneg %p66
        %p293 = pneg %p90
        %p294 = pneg %p87
        %p295 = pneg %p111
        %p296 = pneg %p108
        %p297 = pneg %p132
        %p298 = pneg %p129
        %p299 = pneg %p153
        %p300 = pneg %p150
        %p301 = pneg %p174
        %p302 = pneg %p171
        %p303 = pneg %p195
        %p304 = pneg %p192
        %p305 = pneg %p221
        %p306 = pneg %p218
        %s307 = sand.u32 %s208, 1
        %s308 = scalar_lea.sflag [#allocation3], %s307
        %s309 = sand.u32 %s208, 1
        %s310 = smul.addr %s309, 16
        %s311 = scalar_lea.vmem [#allocation2], %s310
        %p312 = scmp.lt.s32.totalorder %s22, 1
        %s313 = scalar_select %p312, %s22, 1
        %s314 = smul.addr %s313, 8
        %s315 = scalar_lea.vmem %s0, %s314
        %p316 = scmp.lt.s32.totalorder %s22, 1
        %s317 = scalar_select %p316, %s22, 1
        %s318 = smul.addr %s317, 2
        %s319 = smul.addr %s318, 8
        %s320 = scalar_lea.vmem %s1, %s319
        %v321 = vld [vmem:[%s315] sm:$0xff]
        %v322 = vld [vmem:[%s3] sm:$0x1]
        %v323 = vlaneseq
        %v324 = vshrl.u32 %v323, 7
        %vm325 = vcmp.eq.s32.totalorder %v324, 0
        %v326 = vrot.slane %v321, 7
        %v327 = vsel %vm325, 0.0, %v326
        %vm328 = vcmp.eq.s32.totalorder %v324, 7
        %v329 = vrot.slane %v321, 1
        %v330 = vsel %vm328, 0.0, %v329
        %v331 = vld [vmem:[%s2] sm:$0xff]
        %v332 = vld [vmem:[%s2 + $0x8] sm:$0xff]
        %v333 = vld [vmem:[%s2 + $0x10] sm:$0xff]
        %v334 = vld [vmem:[%s2 + $0x18] sm:$0xff]
        %v335 = vld [vmem:[%s2 + $0x20] sm:$0xff]
        %v336 = vld [vmem:[%s2 + $0x28] sm:$0xff]
        %v337 = vld [vmem:[%s2 + $0x30] sm:$0xff]
        %v338 = vld [vmem:[%s2 + $0x38] sm:$0xff]
        %s339 = scalar_lea.vmem %s2, 64
        %v340 = vld [vmem:[%s339] sm:$0xff]
        %v341 = vld [vmem:[%s339 + $0x8] sm:$0xff]
        %v342 = vld [vmem:[%s339 + $0x10] sm:$0xff]
        %v343 = vld [vmem:[%s339 + $0x18] sm:$0xff]
        %v344 = vld [vmem:[%s339 + $0x20] sm:$0xff]
        %v345 = vld [vmem:[%s339 + $0x28] sm:$0xff]
        %v346 = vld [vmem:[%s339 + $0x30] sm:$0xff]
        %v347 = vld [vmem:[%s339 + $0x38] sm:$0xff]
        %vm348 = vcmask 523264
        %v350 = vsel %vm348, %v321, 0
        %352 = vmatprep.subr.mxu0 0.0
        %353 = vmatpush1.msra.mxu0 %v340
        %354 = vmatprep.subr.mxu0 0.0
        %355 = vmatpush1.msra.mxu0 %v341
        %356 = vmatprep.subr.mxu0 0.0
        %357 = vmatpush1.msra.mxu0 %v342
        %358 = vmatprep.subr.mxu0 0.0
        %359 = vmatpush1.msra.mxu0 %v343
        %360 = vmatprep.subr.mxu0 0.0
        %361 = vmatpush1.msra.mxu0 %v344
        %362 = vmatprep.subr.mxu0 0.0
        %363 = vmatpush1.msra.mxu0 %v345
        %364 = vmatprep.subr.mxu0 0.0
        %365 = vmatpush1.msra.mxu0 %v346
        %366 = vmatprep.subr.mxu0 0.0
        %367 = vmatpush1.msra.mxu0 %v347
        %368 = vmatprep.subr.mxu0 0.0
        %369 = vmatpush1.msra.mxu0 0.0
        %370 = vmatprep.subr.mxu0 0.0
        %371 = vmatpush1.msra.mxu0 0.0
        %372 = vmatprep.subr.mxu0 0.0
        %373 = vmatpush1.msra.mxu0 0.0
        %374 = vmatprep.subr.mxu0 0.0
        %375 = vmatpush1.msra.mxu0 0.0
        %376 = vmatprep.subr.mxu0 0.0
        %377 = vmatpush1.msra.mxu0 0.0
        %378 = vmatprep.subr.mxu0 0.0
        %379 = vmatpush1.msra.mxu0 0.0
        %380 = vmatprep.subr.mxu0 0.0
        %381 = vmatpush1.msra.mxu0 0.0
        %382 = vmatprep.subr.mxu0 0.0
        %383 = vmatpush1.msra.mxu0 0.0
        %384 = vmatprep.subr.mxu0 0.0
        %385 = vmatpush1.msra.mxu0 0.0
        %386 = vmatprep.subr.mxu0 0.0
        %387 = vmatpush1.msra.mxu0 0.0
        %388 = vmatprep.subr.mxu0 0.0
        %389 = vmatpush1.msra.mxu0 0.0
        %390 = vmatprep.subr.mxu0 0.0
        %391 = vmatpush1.msra.mxu0 0.0
        %392 = vmatprep.subr.mxu0 0.0
        %393 = vmatpush1.msra.mxu0 0.0
        %394 = vmatprep.subr.mxu0 0.0
        %395 = vmatpush1.msra.mxu0 0.0
        %396 = vmatprep.subr.mxu0 0.0
        %397 = vmatpush1.msra.mxu0 0.0
        %398 = vmatprep.subr.mxu0 0.0
        %399 = vmatpush1.msra.mxu0 0.0
        %400 = vmatprep.subr.mxu0 0.0
        %401 = vmatpush1.msra.mxu0 0.0
        %402 = vmatprep.subr.mxu0 0.0
        %403 = vmatpush1.msra.mxu0 0.0
        %404 = vmatprep.subr.mxu0 0.0
        %405 = vmatpush1.msra.mxu0 0.0
        %406 = vmatprep.subr.mxu0 0.0
        %407 = vmatpush1.msra.mxu0 0.0
        %408 = vmatprep.subr.mxu0 0.0
        %409 = vmatpush1.msra.mxu0 0.0
        %410 = vmatprep.subr.mxu0 0.0
        %411 = vmatpush1.msra.mxu0 0.0
        %412 = vmatprep.subr.mxu0 0.0
        %413 = vmatpush1.msra.mxu0 0.0
        %414 = vmatprep.subr.mxu0 0.0
        %415 = vmatpush1.msra.mxu0 0.0
        %416 = vmatprep.mubr.f32.mxu0 0.0
        %417 = vmatmul.mubr.f32.gmra.mrb[0].mxu0 %v350
        %v418 = vpop.f32.mrb[0].mxu0
        %v419 = vadd.f32 0.0, %v418
        %v420 = vpop.f32.mrb[0].mxu0
        %421 = vdwg.mxu0
        %v423 = vsel %vm348, %v327, 0
        %425 = vmatprep.subr.mxu0 0.0
        %426 = vmatpush1.msra.mxu0 %v331
        %427 = vmatprep.subr.mxu0 0.0
        %428 = vmatpush1.msra.mxu0 %v332
        %429 = vmatprep.subr.mxu0 0.0
        %430 = vmatpush1.msra.mxu0 %v333
        %431 = vmatprep.subr.mxu0 0.0
        %432 = vmatpush1.msra.mxu0 %v334
        %433 = vmatprep.subr.mxu0 0.0
        %434 = vmatpush1.msra.mxu0 %v335
        %435 = vmatprep.subr.mxu0 0.0
        %436 = vmatpush1.msra.mxu0 %v336
        %437 = vmatprep.subr.mxu0 0.0
        %438 = vmatpush1.msra.mxu0 %v337
        %439 = vmatprep.subr.mxu0 0.0
        %440 = vmatpush1.msra.mxu0 %v338
        %441 = vmatprep.subr.mxu0 0.0
        %442 = vmatpush1.msra.mxu0 0.0
        %443 = vmatprep.subr.mxu0 0.0
        %444 = vmatpush1.msra.mxu0 0.0
        %445 = vmatprep.subr.mxu0 0.0
        %446 = vmatpush1.msra.mxu0 0.0
        %447 = vmatprep.subr.mxu0 0.0
        %448 = vmatpush1.msra.mxu0 0.0
        %449 = vmatprep.subr.mxu0 0.0
        %450 = vmatpush1.msra.mxu0 0.0
        %451 = vmatprep.subr.mxu0 0.0
        %452 = vmatpush1.msra.mxu0 0.0
        %453 = vmatprep.subr.mxu0 0.0
        %454 = vmatpush1.msra.mxu0 0.0
        %455 = vmatprep.subr.mxu0 0.0
        %456 = vmatpush1.msra.mxu0 0.0
        %457 = vmatprep.subr.mxu0 0.0
        %458 = vmatpush1.msra.mxu0 0.0
        %459 = vmatprep.subr.mxu0 0.0
        %460 = vmatpush1.msra.mxu0 0.0
        %461 = vmatprep.subr.mxu0 0.0
        %462 = vmatpush1.msra.mxu0 0.0
        %463 = vmatprep.subr.mxu0 0.0
        %464 = vmatpush1.msra.mxu0 0.0
        %465 = vmatprep.subr.mxu0 0.0
        %466 = vmatpush1.msra.mxu0 0.0
        %467 = vmatprep.subr.mxu0 0.0
        %468 = vmatpush1.msra.mxu0 0.0
        %469 = vmatprep.subr.mxu0 0.0
        %470 = vmatpush1.msra.mxu0 0.0
        %471 = vmatprep.subr.mxu0 0.0
        %472 = vmatpush1.msra.mxu0 0.0
        %473 = vmatprep.subr.mxu0 0.0
        %474 = vmatpush1.msra.mxu0 0.0
        %475 = vmatprep.subr.mxu0 0.0
        %476 = vmatpush1.msra.mxu0 0.0
        %477 = vmatprep.subr.mxu0 0.0
        %478 = vmatpush1.msra.mxu0 0.0
        %479 = vmatprep.subr.mxu0 0.0
        %480 = vmatpush1.msra.mxu0 0.0
        %481 = vmatprep.subr.mxu0 0.0
        %482 = vmatpush1.msra.mxu0 0.0
        %483 = vmatprep.subr.mxu0 0.0
        %484 = vmatpush1.msra.mxu0 0.0
        %485 = vmatprep.subr.mxu0 0.0
        %486 = vmatpush1.msra.mxu0 0.0
        %487 = vmatprep.subr.mxu0 0.0
        %488 = vmatpush1.msra.mxu0 0.0
        %489 = vmatprep.mubr.f32.mxu0 0.0
        %490 = vmatmul.mubr.f32.gmra.mrb[0].mxu0 %v423
        %v491 = vpop.f32.mrb[0].mxu0
        %v492 = vadd.f32 %v419, %v491
        %v493 = vpop.f32.mrb[0].mxu0
        %494 = vdwg.mxu0
        %s495 = scalar_lea.vmem %s2, 128
        %v496 = vld [vmem:[%s495] sm:$0xff]
        %v497 = vld [vmem:[%s495 + $0x8] sm:$0xff]
        %v498 = vld [vmem:[%s495 + $0x10] sm:$0xff]
        %v499 = vld [vmem:[%s495 + $0x18] sm:$0xff]
        %v500 = vld [vmem:[%s495 + $0x20] sm:$0xff]
        %v501 = vld [vmem:[%s495 + $0x28] sm:$0xff]
        %v502 = vld [vmem:[%s495 + $0x30] sm:$0xff]
        %v503 = vld [vmem:[%s495 + $0x38] sm:$0xff]
        %v505 = vsel %vm348, %v330, 0
        %507 = vmatprep.subr.mxu0 0.0
        %508 = vmatpush1.msra.mxu0 %v496
        %509 = vmatprep.subr.mxu0 0.0
        %510 = vmatpush1.msra.mxu0 %v497
        %511 = vmatprep.subr.mxu0 0.0
        %512 = vmatpush1.msra.mxu0 %v498
        %513 = vmatprep.subr.mxu0 0.0
        %514 = vmatpush1.msra.mxu0 %v499
        %515 = vmatprep.subr.mxu0 0.0
        %516 = vmatpush1.msra.mxu0 %v500
        %517 = vmatprep.subr.mxu0 0.0
        %518 = vmatpush1.msra.mxu0 %v501
        %519 = vmatprep.subr.mxu0 0.0
        %520 = vmatpush1.msra.mxu0 %v502
        %521 = vmatprep.subr.mxu0 0.0
        %522 = vmatpush1.msra.mxu0 %v503
        %523 = vmatprep.subr.mxu0 0.0
        %524 = vmatpush1.msra.mxu0 0.0
        %525 = vmatprep.subr.mxu0 0.0
        %526 = vmatpush1.msra.mxu0 0.0
        %527 = vmatprep.subr.mxu0 0.0
        %528 = vmatpush1.msra.mxu0 0.0
        %529 = vmatprep.subr.mxu0 0.0
        %530 = vmatpush1.msra.mxu0 0.0
        %531 = vmatprep.subr.mxu0 0.0
        %532 = vmatpush1.msra.mxu0 0.0
        %533 = vmatprep.subr.mxu0 0.0
        %534 = vmatpush1.msra.mxu0 0.0
        %535 = vmatprep.subr.mxu0 0.0
        %536 = vmatpush1.msra.mxu0 0.0
        %537 = vmatprep.subr.mxu0 0.0
        %538 = vmatpush1.msra.mxu0 0.0
        %539 = vmatprep.subr.mxu0 0.0
        %540 = vmatpush1.msra.mxu0 0.0
        %541 = vmatprep.subr.mxu0 0.0
        %542 = vmatpush1.msra.mxu0 0.0
        %543 = vmatprep.subr.mxu0 0.0
        %544 = vmatpush1.msra.mxu0 0.0
        %545 = vmatprep.subr.mxu0 0.0
        %546 = vmatpush1.msra.mxu0 0.0
        %547 = vmatprep.subr.mxu0 0.0
        %548 = vmatpush1.msra.mxu0 0.0
        %549 = vmatprep.subr.mxu0 0.0
        %550 = vmatpush1.msra.mxu0 0.0
        %551 = vmatprep.subr.mxu0 0.0
        %552 = vmatpush1.msra.mxu0 0.0
        %553 = vmatprep.subr.mxu0 0.0
        %554 = vmatpush1.msra.mxu0 0.0
        %555 = vmatprep.subr.mxu0 0.0
        %556 = vmatpush1.msra.mxu0 0.0
        %557 = vmatprep.subr.mxu0 0.0
        %558 = vmatpush1.msra.mxu0 0.0
        %559 = vmatprep.subr.mxu0 0.0
        %560 = vmatpush1.msra.mxu0 0.0
        %561 = vmatprep.subr.mxu0 0.0
        %562 = vmatpush1.msra.mxu0 0.0
        %563 = vmatprep.subr.mxu0 0.0
        %564 = vmatpush1.msra.mxu0 0.0
        %565 = vmatprep.subr.mxu0 0.0
        %566 = vmatpush1.msra.mxu0 0.0
        %567 = vmatprep.subr.mxu0 0.0
        %568 = vmatpush1.msra.mxu0 0.0
        %569 = vmatprep.subr.mxu0 0.0
        %570 = vmatpush1.msra.mxu0 0.0
        %571 = vmatprep.mubr.f32.mxu0 0.0
        %572 = vmatmul.mubr.f32.gmra.mrb[0].mxu0 %v505
        %v573 = vpop.f32.mrb[0].mxu0
        %v574 = vadd.f32 0.0, %v573
        %v575 = vpop.f32.mrb[0].mxu0
        %576 = vdwg.mxu0
        %v577 = vadd.f32 %v492, %v574
        %v579 = vlaneseq
        %v580 = vshrl.u32 %v579, 7
        %v581 = vsub.s32 0, %v580
        %v582 = vrot.slane %v322, %v581
        %v584 = vadd.f32 %v577, %v582
        %v585 = vmax.f32 %v584, 0.0
        %v586 = vld [vmem:[%s5] sm:$0xff]
        %v587 = vld [vmem:[%s5 + $0x8] sm:$0xff]
        %v588 = vld [vmem:[%s5 + $0x10] sm:$0xff]
        %v589 = vld [vmem:[%s5 + $0x18] sm:$0xff]
        %vm590 = vcmask 261120
        %v592 = vsel %vm590, %v585, 0
        %594 = vmatprep.subr.mxu0 0.0
        %595 = vmatpush1.msra.mxu0 %v586
        %596 = vmatprep.subr.mxu0 0.0
        %597 = vmatpush1.msra.mxu0 %v587
        %598 = vmatprep.subr.mxu0 0.0
        %599 = vmatpush1.msra.mxu0 %v588
        %600 = vmatprep.subr.mxu0 0.0
        %601 = vmatpush1.msra.mxu0 %v589
        %602 = vmatprep.subr.mxu0 0.0
        %603 = vmatpush1.msra.mxu0 0.0
        %604 = vmatprep.subr.mxu0 0.0
        %605 = vmatpush1.msra.mxu0 0.0
        %606 = vmatprep.subr.mxu0 0.0
        %607 = vmatpush1.msra.mxu0 0.0
        %608 = vmatprep.subr.mxu0 0.0
        %609 = vmatpush1.msra.mxu0 0.0
        %610 = vmatprep.subr.mxu0 0.0
        %611 = vmatpush1.msra.mxu0 0.0
        %612 = vmatprep.subr.mxu0 0.0
        %613 = vmatpush1.msra.mxu0 0.0
        %614 = vmatprep.subr.mxu0 0.0
        %615 = vmatpush1.msra.mxu0 0.0
        %616 = vmatprep.subr.mxu0 0.0
        %617 = vmatpush1.msra.mxu0 0.0
        %618 = vmatprep.subr.mxu0 0.0
        %619 = vmatpush1.msra.mxu0 0.0
        %620 = vmatprep.subr.mxu0 0.0
        %621 = vmatpush1.msra.mxu0 0.0
        %622 = vmatprep.subr.mxu0 0.0
        %623 = vmatpush1.msra.mxu0 0.0
        %624 = vmatprep.subr.mxu0 0.0
        %625 = vmatpush1.msra.mxu0 0.0
        %626 = vmatprep.subr.mxu0 0.0
        %627 = vmatpush1.msra.mxu0 0.0
        %628 = vmatprep.subr.mxu0 0.0
        %629 = vmatpush1.msra.mxu0 0.0
        %630 = vmatprep.subr.mxu0 0.0
        %631 = vmatpush1.msra.mxu0 0.0
        %632 = vmatprep.subr.mxu0 0.0
        %633 = vmatpush1.msra.mxu0 0.0
        %634 = vmatprep.subr.mxu0 0.0
        %635 = vmatpush1.msra.mxu0 0.0
        %636 = vmatprep.subr.mxu0 0.0
        %637 = vmatpush1.msra.mxu0 0.0
        %638 = vmatprep.subr.mxu0 0.0
        %639 = vmatpush1.msra.mxu0 0.0
        %640 = vmatprep.subr.mxu0 0.0
        %641 = vmatpush1.msra.mxu0 0.0
        %642 = vmatprep.subr.mxu0 0.0
        %643 = vmatpush1.msra.mxu0 0.0
        %644 = vmatprep.subr.mxu0 0.0
        %645 = vmatpush1.msra.mxu0 0.0
        %646 = vmatprep.subr.mxu0 0.0
        %647 = vmatpush1.msra.mxu0 0.0
        %648 = vmatprep.subr.mxu0 0.0
        %649 = vmatpush1.msra.mxu0 0.0
        %650 = vmatprep.subr.mxu0 0.0
        %651 = vmatpush1.msra.mxu0 0.0
        %652 = vmatprep.subr.mxu0 0.0
        %653 = vmatpush1.msra.mxu0 0.0
        %654 = vmatprep.subr.mxu0 0.0
        %655 = vmatpush1.msra.mxu0 0.0
        %656 = vmatprep.subr.mxu0 0.0
        %657 = vmatpush1.msra.mxu0 0.0
        %658 = vmatprep.mubr.f32.mxu0 0.0
        %659 = vmatmul.mubr.f32.gmra.mrb[0].mxu0 %v592
        %v660 = vpop.f32.mrb[0].mxu0
        %v661 = vadd.f32 0.0, %v660
        %v662 = vpop.f32.mrb[0].mxu0
        %663 = vdwg.mxu0
        %v664 = vld [vmem:[%s4] sm:$0xff]
        %v665 = vld [vmem:[%s4 + $0x8] sm:$0xff]
        %v666 = vld [vmem:[%s320] sm:$0xff]
        %v667 = vld [vmem:[%s320 + $0x8] sm:$0xff]
        %vm668 = vcmask 64512
        %v670 = vsel %vm668, %v664, 0
        %v673 = vsel %vm668, %v665, 0
        %675 = vmatprep.subr.mxu0 0.0
        %676 = vmatpush1.msra.mxu0 %v661
        %677 = vmatprep.subr.mxu0 0.0
        %678 = vmatpush1.msra.mxu0 0.0
        %679 = vmatprep.subr.mxu0 0.0
        %680 = vmatpush1.msra.mxu0 0.0
        %681 = vmatprep.subr.mxu0 0.0
        %682 = vmatpush1.msra.mxu0 0.0
        %683 = vmatprep.subr.mxu0 0.0
        %684 = vmatpush1.msra.mxu0 0.0
        %685 = vmatprep.subr.mxu0 0.0
        %686 = vmatpush1.msra.mxu0 0.0
        %687 = vmatprep.subr.mxu0 0.0
        %688 = vmatpush1.msra.mxu0 0.0
        %689 = vmatprep.subr.mxu0 0.0
        %690 = vmatpush1.msra.mxu0 0.0
        %691 = vmatprep.subr.mxu0 0.0
        %692 = vmatpush1.msra.mxu0 0.0
        %693 = vmatprep.subr.mxu0 0.0
        %694 = vmatpush1.msra.mxu0 0.0
        %695 = vmatprep.subr.mxu0 0.0
        %696 = vmatpush1.msra.mxu0 0.0
        %697 = vmatprep.subr.mxu0 0.0
        %698 = vmatpush1.msra.mxu0 0.0
        %699 = vmatprep.subr.mxu0 0.0
        %700 = vmatpush1.msra.mxu0 0.0
        %701 = vmatprep.subr.mxu0 0.0
        %702 = vmatpush1.msra.mxu0 0.0
        %703 = vmatprep.subr.mxu0 0.0
        %704 = vmatpush1.msra.mxu0 0.0
        %705 = vmatprep.subr.mxu0 0.0
        %706 = vmatpush1.msra.mxu0 0.0
        %707 = vmatprep.subr.mxu0 0.0
        %708 = vmatpush1.msra.mxu0 0.0
        %709 = vmatprep.subr.mxu0 0.0
        %710 = vmatpush1.msra.mxu0 0.0
        %711 = vmatprep.subr.mxu0 0.0
        %712 = vmatpush1.msra.mxu0 0.0
        %713 = vmatprep.subr.mxu0 0.0
        %714 = vmatpush1.msra.mxu0 0.0
        %715 = vmatprep.subr.mxu0 0.0
        %716 = vmatpush1.msra.mxu0 0.0
        %717 = vmatprep.subr.mxu0 0.0
        %718 = vmatpush1.msra.mxu0 0.0
        %719 = vmatprep.subr.mxu0 0.0
        %720 = vmatpush1.msra.mxu0 0.0
        %721 = vmatprep.subr.mxu0 0.0
        %722 = vmatpush1.msra.mxu0 0.0
        %723 = vmatprep.subr.mxu0 0.0
        %724 = vmatpush1.msra.mxu0 0.0
        %725 = vmatprep.subr.mxu0 0.0
        %726 = vmatpush1.msra.mxu0 0.0
        %727 = vmatprep.subr.mxu0 0.0
        %728 = vmatpush1.msra.mxu0 0.0
        %729 = vmatprep.subr.mxu0 0.0
        %730 = vmatpush1.msra.mxu0 0.0
        %731 = vmatprep.subr.mxu0 0.0
        %732 = vmatpush1.msra.mxu0 0.0
        %733 = vmatprep.subr.mxu0 0.0
        %734 = vmatpush1.msra.mxu0 0.0
        %735 = vmatprep.subr.mxu0 0.0
        %736 = vmatpush1.msra.mxu0 0.0
        %737 = vmatprep.subr.mxu0 0.0
        %738 = vmatpush1.msra.mxu0 0.0
        %739 = vmatprep.mubr.f32.mxu0 0.0
        %740 = vmatmul.mubr.f32.gmra.mrb[0].mxu0 %v670
        %v741 = vpop.f32.mrb[0].mxu0
        %v742 = vadd.f32 %v666, %v741
        %v743 = vpop.f32.mrb[0].mxu0
        %744 = vmatprep.mubr.f32.mxu0 0.0
        %745 = vmatmul.mubr.f32.gmra.mrb[0].mxu0 %v673
        %v746 = vpop.f32.mrb[0].mxu0
        %v747 = vadd.f32 %v667, %v746
        %v748 = vpop.f32.mrb[0].mxu0
        %749 = vdwg.mxu0
        %v750 = vld [vmem:[%s7] sm:$0x1]
        %v751 = vadd.s32 %v324, 8
        %vm752 = vcmp.eq.s32.totalorder %v751, 0
        %v753 = vrot.slane %v742, 7
        %v754 = vrot.slane %v747, 7
        %vm755 = vcmp.lt.s32.totalorder %v324, 1
        %v756 = vsel %vm755, %v753, %v754
        %v757 = vsel %vm755, %v754, %v753
        %v758 = vsel %vm325, 0.0, %v757
        %v759 = vsel %vm752, 0.0, %v756
        %vm760 = vcmp.eq.s32.totalorder %v324, 15
        %vm761 = vcmp.eq.s32.totalorder %v751, 15
        %v762 = vrot.slane %v742, 1
        %v763 = vrot.slane %v747, 1
        %vm764 = vcmp.lt.s32.totalorder %v324, 7
        %v765 = vsel %vm764, %v762, %v763
        %v766 = vsel %vm764, %v763, %v762
        %v767 = vsel %vm760, 0.0, %v765
        %v768 = vsel %vm761, 0.0, %v766
        %v769 = vld [vmem:[%s6] sm:$0xff]
        %v770 = vld [vmem:[%s6 + $0x8] sm:$0xff]
        %v771 = vld [vmem:[%s6 + $0x10] sm:$0xff]
        %v772 = vld [vmem:[%s6 + $0x18] sm:$0xff]
        %v773 = vld [vmem:[%s6 + $0x20] sm:$0xff]
        %v774 = vld [vmem:[%s6 + $0x28] sm:$0xff]
        %v775 = vld [vmem:[%s6 + $0x30] sm:$0xff]
        %v776 = vld [vmem:[%s6 + $0x38] sm:$0xff]
        %s777 = scalar_lea.vmem %s6, 64
        %v778 = vld [vmem:[%s777] sm:$0xff]
        %v779 = vld [vmem:[%s777 + $0x8] sm:$0xff]
        %v780 = vld [vmem:[%s777 + $0x10] sm:$0xff]
        %v781 = vld [vmem:[%s777 + $0x18] sm:$0xff]
        %v782 = vld [vmem:[%s777 + $0x20] sm:$0xff]
        %v783 = vld [vmem:[%s777 + $0x28] sm:$0xff]
        %v784 = vld [vmem:[%s777 + $0x30] sm:$0xff]
        %v785 = vld [vmem:[%s777 + $0x38] sm:$0xff]
        %v787 = vsel %vm348, %v742, 0
        %v790 = vsel %vm348, %v747, 0
        %792 = vmatprep.subr.mxu0 0.0
        %793 = vmatpush1.msra.mxu0 %v778
        %794 = vmatprep.subr.mxu0 0.0
        %795 = vmatpush1.msra.mxu0 %v779
        %796 = vmatprep.subr.mxu0 0.0
        %797 = vmatpush1.msra.mxu0 %v780
        %798 = vmatprep.subr.mxu0 0.0
        %799 = vmatpush1.msra.mxu0 %v781
        %800 = vmatprep.subr.mxu0 0.0
        %801 = vmatpush1.msra.mxu0 %v782
        %802 = vmatprep.subr.mxu0 0.0
        %803 = vmatpush1.msra.mxu0 %v783
        %804 = vmatprep.subr.mxu0 0.0
        %805 = vmatpush1.msra.mxu0 %v784
        %806 = vmatprep.subr.mxu0 0.0
        %807 = vmatpush1.msra.mxu0 %v785
        %808 = vmatprep.subr.mxu0 0.0
        %809 = vmatpush1.msra.mxu0 0.0
        %810 = vmatprep.subr.mxu0 0.0
        %811 = vmatpush1.msra.mxu0 0.0
        %812 = vmatprep.subr.mxu0 0.0
        %813 = vmatpush1.msra.mxu0 0.0
        %814 = vmatprep.subr.mxu0 0.0
        %815 = vmatpush1.msra.mxu0 0.0
        %816 = vmatprep.subr.mxu0 0.0
        %817 = vmatpush1.msra.mxu0 0.0
        %818 = vmatprep.subr.mxu0 0.0
        %819 = vmatpush1.msra.mxu0 0.0
        %820 = vmatprep.subr.mxu0 0.0
        %821 = vmatpush1.msra.mxu0 0.0
        %822 = vmatprep.subr.mxu0 0.0
        %823 = vmatpush1.msra.mxu0 0.0
        %824 = vmatprep.subr.mxu0 0.0
        %825 = vmatpush1.msra.mxu0 0.0
        %826 = vmatprep.subr.mxu0 0.0
        %827 = vmatpush1.msra.mxu0 0.0
        %828 = vmatprep.subr.mxu0 0.0
        %829 = vmatpush1.msra.mxu0 0.0
        %830 = vmatprep.subr.mxu0 0.0
        %831 = vmatpush1.msra.mxu0 0.0
        %832 = vmatprep.subr.mxu0 0.0
        %833 = vmatpush1.msra.mxu0 0.0
        %834 = vmatprep.subr.mxu0 0.0
        %835 = vmatpush1.msra.mxu0 0.0
        %836 = vmatprep.subr.mxu0 0.0
        %837 = vmatpush1.msra.mxu0 0.0
        %838 = vmatprep.subr.mxu0 0.0
        %839 = vmatpush1.msra.mxu0 0.0
        %840 = vmatprep.subr.mxu0 0.0
        %841 = vmatpush1.msra.mxu0 0.0
        %842 = vmatprep.subr.mxu0 0.0
        %843 = vmatpush1.msra.mxu0 0.0
        %844 = vmatprep.subr.mxu0 0.0
        %845 = vmatpush1.msra.mxu0 0.0
        %846 = vmatprep.subr.mxu0 0.0
        %847 = vmatpush1.msra.mxu0 0.0
        %848 = vmatprep.subr.mxu0 0.0
        %849 = vmatpush1.msra.mxu0 0.0
        %850 = vmatprep.subr.mxu0 0.0
        %851 = vmatpush1.msra.mxu0 0.0
        %852 = vmatprep.subr.mxu0 0.0
        %853 = vmatpush1.msra.mxu0 0.0
        %854 = vmatprep.subr.mxu0 0.0
        %855 = vmatpush1.msra.mxu0 0.0
        %856 = vmatprep.mubr.f32.mxu0 0.0
        %857 = vmatmul.mubr.f32.gmra.mrb[0].mxu0 %v787
        %v858 = vpop.f32.mrb[0].mxu0
        %v859 = vadd.f32 0.0, %v858
        %v860 = vpop.f32.mrb[0].mxu0
        %861 = vmatprep.mubr.f32.mxu0 0.0
        %862 = vmatmul.mubr.f32.gmra.mrb[0].mxu0 %v790
        %v863 = vpop.f32.mrb[0].mxu0
        %v864 = vadd.f32 0.0, %v863
        %v865 = vpop.f32.mrb[0].mxu0
        %866 = vdwg.mxu0
        %v868 = vsel %vm348, %v758, 0
        %v871 = vsel %vm348, %v759, 0
        %873 = vmatprep.subr.mxu0 0.0
        %874 = vmatpush1.msra.mxu0 %v769
        %875 = vmatprep.subr.mxu0 0.0
        %876 = vmatpush1.msra.mxu0 %v770
        %877 = vmatprep.subr.mxu0 0.0
        %878 = vmatpush1.msra.mxu0 %v771
        %879 = vmatprep.subr.mxu0 0.0
        %880 = vmatpush1.msra.mxu0 %v772
        %881 = vmatprep.subr.mxu0 0.0
        %882 = vmatpush1.msra.mxu0 %v773
        %883 = vmatprep.subr.mxu0 0.0
        %884 = vmatpush1.msra.mxu0 %v774
        %885 = vmatprep.subr.mxu0 0.0
        %886 = vmatpush1.msra.mxu0 %v775
        %887 = vmatprep.subr.mxu0 0.0
        %888 = vmatpush1.msra.mxu0 %v776
        %889 = vmatprep.subr.mxu0 0.0
        %890 = vmatpush1.msra.mxu0 0.0
        %891 = vmatprep.subr.mxu0 0.0
        %892 = vmatpush1.msra.mxu0 0.0
        %893 = vmatprep.subr.mxu0 0.0
        %894 = vmatpush1.msra.mxu0 0.0
        %895 = vmatprep.subr.mxu0 0.0
        %896 = vmatpush1.msra.mxu0 0.0
        %897 = vmatprep.subr.mxu0 0.0
        %898 = vmatpush1.msra.mxu0 0.0
        %899 = vmatprep.subr.mxu0 0.0
        %900 = vmatpush1.msra.mxu0 0.0
        %901 = vmatprep.subr.mxu0 0.0
        %902 = vmatpush1.msra.mxu0 0.0
        %903 = vmatprep.subr.mxu0 0.0
        %904 = vmatpush1.msra.mxu0 0.0
        %905 = vmatprep.subr.mxu0 0.0
        %906 = vmatpush1.msra.mxu0 0.0
        %907 = vmatprep.subr.mxu0 0.0
        %908 = vmatpush1.msra.mxu0 0.0
        %909 = vmatprep.subr.mxu0 0.0
        %910 = vmatpush1.msra.mxu0 0.0
        %911 = vmatprep.subr.mxu0 0.0
        %912 = vmatpush1.msra.mxu0 0.0
        %913 = vmatprep.subr.mxu0 0.0
        %914 = vmatpush1.msra.mxu0 0.0
        %915 = vmatprep.subr.mxu0 0.0
        %916 = vmatpush1.msra.mxu0 0.0
        %917 = vmatprep.subr.mxu0 0.0
        %918 = vmatpush1.msra.mxu0 0.0
        %919 = vmatprep.subr.mxu0 0.0
        %920 = vmatpush1.msra.mxu0 0.0
        %921 = vmatprep.subr.mxu0 0.0
        %922 = vmatpush1.msra.mxu0 0.0
        %923 = vmatprep.subr.mxu0 0.0
        %924 = vmatpush1.msra.mxu0 0.0
        %925 = vmatprep.subr.mxu0 0.0
        %926 = vmatpush1.msra.mxu0 0.0
        %927 = vmatprep.subr.mxu0 0.0
        %928 = vmatpush1.msra.mxu0 0.0
        %929 = vmatprep.subr.mxu0 0.0
        %930 = vmatpush1.msra.mxu0 0.0
        %931 = vmatprep.subr.mxu0 0.0
        %932 = vmatpush1.msra.mxu0 0.0
        %933 = vmatprep.subr.mxu0 0.0
        %934 = vmatpush1.msra.mxu0 0.0
        %935 = vmatprep.subr.mxu0 0.0
        %936 = vmatpush1.msra.mxu0 0.0
        %937 = vmatprep.mubr.f32.mxu0 0.0
        %938 = vmatmul.mubr.f32.gmra.mrb[0].mxu0 %v868
        %v939 = vpop.f32.mrb[0].mxu0
        %v940 = vadd.f32 %v859, %v939
        %v941 = vpop.f32.mrb[0].mxu0
        %942 = vmatprep.mubr.f32.mxu0 0.0
        %943 = vmatmul.mubr.f32.gmra.mrb[0].mxu0 %v871
        %v944 = vpop.f32.mrb[0].mxu0
        %v945 = vadd.f32 %v864, %v944
        %v946 = vpop.f32.mrb[0].mxu0
        %947 = vdwg.mxu0
        %s948 = scalar_lea.vmem %s6, 128
        %v949 = vld [vmem:[%s948] sm:$0xff]
        %v950 = vld [vmem:[%s948 + $0x8] sm:$0xff]
        %v951 = vld [vmem:[%s948 + $0x10] sm:$0xff]
        %v952 = vld [vmem:[%s948 + $0x18] sm:$0xff]
        %v953 = vld [vmem:[%s948 + $0x20] sm:$0xff]
        %v954 = vld [vmem:[%s948 + $0x28] sm:$0xff]
        %v955 = vld [vmem:[%s948 + $0x30] sm:$0xff]
        %v956 = vld [vmem:[%s948 + $0x38] sm:$0xff]
        %v958 = vsel %vm348, %v767, 0
        %v961 = vsel %vm348, %v768, 0
        %963 = vmatprep.subr.mxu0 0.0
        %964 = vmatpush1.msra.mxu0 %v949
        %965 = vmatprep.subr.mxu0 0.0
        %966 = vmatpush1.msra.mxu0 %v950
        %967 = vmatprep.subr.mxu0 0.0
        %968 = vmatpush1.msra.mxu0 %v951
        %969 = vmatprep.subr.mxu0 0.0
        %970 = vmatpush1.msra.mxu0 %v952
        %971 = vmatprep.subr.mxu0 0.0
        %972 = vmatpush1.msra.mxu0 %v953
        %973 = vmatprep.subr.mxu0 0.0
        %974 = vmatpush1.msra.mxu0 %v954
        %975 = vmatprep.subr.mxu0 0.0
        %976 = vmatpush1.msra.mxu0 %v955
        %977 = vmatprep.subr.mxu0 0.0
        %978 = vmatpush1.msra.mxu0 %v956
        %979 = vmatprep.subr.mxu0 0.0
        %980 = vmatpush1.msra.mxu0 0.0
        %981 = vmatprep.subr.mxu0 0.0
        %982 = vmatpush1.msra.mxu0 0.0
        %983 = vmatprep.subr.mxu0 0.0
        %984 = vmatpush1.msra.mxu0 0.0
        %985 = vmatprep.subr.mxu0 0.0
        %986 = vmatpush1.msra.mxu0 0.0
        %987 = vmatprep.subr.mxu0 0.0
        %988 = vmatpush1.msra.mxu0 0.0
        %989 = vmatprep.subr.mxu0 0.0
        %990 = vmatpush1.msra.mxu0 0.0
        %991 = vmatprep.subr.mxu0 0.0
        %992 = vmatpush1.msra.mxu0 0.0
        %993 = vmatprep.subr.mxu0 0.0
        %994 = vmatpush1.msra.mxu0 0.0
        %995 = vmatprep.subr.mxu0 0.0
        %996 = vmatpush1.msra.mxu0 0.0
        %997 = vmatprep.subr.mxu0 0.0
        %998 = vmatpush1.msra.mxu0 0.0
        %999 = vmatprep.subr.mxu0 0.0
        %1000 = vmatpush1.msra.mxu0 0.0
        %1001 = vmatprep.subr.mxu0 0.0
        %1002 = vmatpush1.msra.mxu0 0.0
        %1003 = vmatprep.subr.mxu0 0.0
        %1004 = vmatpush1.msra.mxu0 0.0
        %1005 = vmatprep.subr.mxu0 0.0
        %1006 = vmatpush1.msra.mxu0 0.0
        %1007 = vmatprep.subr.mxu0 0.0
        %1008 = vmatpush1.msra.mxu0 0.0
        %1009 = vmatprep.subr.mxu0 0.0
        %1010 = vmatpush1.msra.mxu0 0.0
        %1011 = vmatprep.subr.mxu0 0.0
        %1012 = vmatpush1.msra.mxu0 0.0
        %1013 = vmatprep.subr.mxu0 0.0
        %1014 = vmatpush1.msra.mxu0 0.0
        %1015 = vmatprep.subr.mxu0 0.0
        %1016 = vmatpush1.msra.mxu0 0.0
        %1017 = vmatprep.subr.mxu0 0.0
        %1018 = vmatpush1.msra.mxu0 0.0
        %1019 = vmatprep.subr.mxu0 0.0
        %1020 = vmatpush1.msra.mxu0 0.0
        %1021 = vmatprep.subr.mxu0 0.0
        %1022 = vmatpush1.msra.mxu0 0.0
        %1023 = vmatprep.subr.mxu0 0.0
        %1024 = vmatpush1.msra.mxu0 0.0
        %1025 = vmatprep.subr.mxu0 0.0
        %1026 = vmatpush1.msra.mxu0 0.0
        %1027 = vmatprep.mubr.f32.mxu0 0.0
        %1028 = vmatmul.mubr.f32.gmra.mrb[0].mxu0 %v958
        %v1029 = vpop.f32.mrb[0].mxu0
        %v1030 = vadd.f32 0.0, %v1029
        %v1031 = vpop.f32.mrb[0].mxu0
        %1032 = vmatprep.mubr.f32.mxu0 0.0
        %1033 = vmatmul.mubr.f32.gmra.mrb[0].mxu0 %v961
        %v1034 = vpop.f32.mrb[0].mxu0
        %v1035 = vadd.f32 0.0, %v1034
        %v1036 = vpop.f32.mrb[0].mxu0
        %1037 = vdwg.mxu0
        %v1038 = vadd.f32 %v940, %v1030
        %v1039 = vadd.f32 %v945, %v1035
        %v1041 = vlaneseq
        %v1042 = vshrl.u32 %v1041, 7
        %v1043 = vsub.s32 0, %v1042
        %v1044 = vrot.slane %v750, %v1043
        %v1046 = vadd.f32 %v1038, %v1044
        %v1047 = vadd.f32 %v1039, %v1044
        %v1048 = vmax.f32 %v1046, 0.0
        %v1049 = vmax.f32 %v1047, 0.0
        %1050 = vst.msk [vmem:[%s311] sm:$0xff] %vm348, %v1048
        %1051 = vst.msk [vmem:[%s311 + $0x8] sm:$0xff] %vm348, %v1049
        %s1052 = sand.u32 %s208, 1
        %s1053 = scalar_lea.sflag [#allocation3], %s1052
        %s1054 = sand.u32 %s208, 1
        %s1055 = smul.addr %s1054, 16
        %s1056 = scalar_lea.vmem [#allocation2], %s1055
        // Predicated region
        $region53: #{tpu_custom_call.1} parent=51 // pred_check
          %p1057 = pneg %p218
        $region54: #{tpu_custom_call.1} parent=51 // pred_check_branch
          %1059 = sbr.rel (%p1057) target = $region56
        $region55: #{tpu_custom_call.1} parent=51 // pred_region
          %s1061 = ssub.s32 256, 256
          %1062 = vsyncadd %s1053, %s1061
          %s1063 = smul.addr %s22, 2
          %s1064 = smul.addr %s1063, 128
          %s1065 = scalar_lea.hbm %s8, %s1064
          %s1066 = sshll.u32 %s1056, 4
          %s1067 = int_to_ptr.vmem [resolvable:$true] %s1066
          %1072 = dma.vmem_to_hbm [thread:$0]  %s1067, 256, %s1065, %s1053, 128, 128, 8
        $region56: #{tpu_custom_call.1} parent=51 // pred_fallthru
          _
      $region52: #{tpu_custom_call.1} parent=5 // pred_fallthru
        _
      %p1073 = scmp.le.s32.totalorder 2, %s17
      // Predicated region
      $region57: #{tpu_custom_call.1} parent=5 // pred_check
        %p1074 = pneg %p1073
      $region58: #{tpu_custom_call.1} parent=5 // pred_check_branch
        %1076 = sbr.rel (%p1074) target = $region60
      $region59: #{tpu_custom_call.1} parent=5 // pred_region
        %s1077 = ssub.s32 %s17, 2
        // Predicated region
        $region61: #{tpu_custom_call.1} parent=59 // pred_check
          %p1078 = pneg %p224
        $region62: #{tpu_custom_call.1} parent=59 // pred_check_branch
          %1080 = sbr.rel (%p1078) target = $region64
        $region63: #{tpu_custom_call.1} parent=59 // pred_region
          %s1081 = sand.u32 %s209, 1
          %s1082 = scalar_lea.sflag [#allocation3], %s1081
          %s1083 = sand.u32 %s209, 1
          %s1084 = smul.addr %s1083, 16
          %s1085 = scalar_lea.vmem [#allocation2], %s1084
          %1086 = dma.done %s1082, 256
        $region64: #{tpu_custom_call.1} parent=59 // pred_fallthru
          _
      $region60: #{tpu_custom_call.1} parent=5 // pred_fallthru
        _
    $region6: #{tpu_custom_call.1} parent=1 // loop_footer
      %s21 = sadd.s32 1, %s17
    $region7: #{tpu_custom_call.1} parent=1 // loop_footer_branch
      %16 = sbr.rel target = $region3
    $region8: #{tpu_custom_call.1} parent=1 // loop_exit
      _
    %1087 = vsyncpa [#allocation3], 1
    %s1088 = scalar_lea.sflag [#allocation3], 1
    %1089 = vsyncpa %s1088, 1

</llo_original>
